<compile_context>
chip_gen: v7x
topology: tpu7x:2x2x1
jax: 0.10.0
libtpu: 0.0.40
codegen_flags: <defaults>
</compile_context>

<pallas_src>
import functools

import jax
import jax.numpy as jnp
from jax import lax
from jax.experimental import pallas as pl
from jax.experimental.pallas import tpu as pltpu


def _round_up(x, m):
    return ((x + m - 1) // m) * m


def inverse_kernel(state_ref, next_ref,
                   w1_ref, b1_ref, w2_ref, b2_ref, w3_ref, b3_ref,
                   out_ref, *, action_size):
    # Layer 1: Linear(F, 2F) + ReLU, with the (next - state) subtraction folded
    # into the MXU as a difference of two dots (f32 accumulation).  The MXU has
    # huge slack at these shapes; this keeps full precision on the difference
    # even with bf16 inputs and removes the lane-sparse VPU subtract.
    w1 = w1_ref[...]
    h1 = (jnp.dot(next_ref[...], w1, preferred_element_type=jnp.float32)
          - jnp.dot(state_ref[...], w1, preferred_element_type=jnp.float32)
          + b1_ref[...])
    h1 = jnp.maximum(h1, 0.0).astype(jnp.bfloat16)                     # (Tb, 2F)

    # Layer 2: Linear(2F, 2F) + ReLU.
    h2 = jnp.dot(h1, w2_ref[...], preferred_element_type=jnp.float32) + b2_ref[...]
    h2 = jnp.maximum(h2, 0.0).astype(jnp.bfloat16)                     # (Tb, 2F)

    # Layer 3: Linear(2F, A_pad) + Tanh, where A_pad = round_up(A, 128) so the
    # tanh / log-softmax tail runs lane-dense straight off the MXU.
    logits = jnp.dot(h2, w3_ref[...], preferred_element_type=jnp.float32) + b3_ref[...]
    logits = jnp.tanh(logits)                                          # (Tb, A_pad)

    # Mask the padded lanes to -inf so they contribute nothing to max / sum.
    lane = lax.broadcasted_iota(jnp.int32, (1, logits.shape[-1]), 1)
    logits = jnp.where(lane < action_size, logits, -jnp.inf)

    # Numerically stable LogSoftmax over the (lane-dense) last axis.
    m = jnp.max(logits, axis=-1, keepdims=True)
    shifted = logits - m
    lse = jnp.log(jnp.sum(jnp.exp(shifted), axis=-1, keepdims=True))
    out_ref[...] = (shifted - lse)[:, :action_size]


def inverse_forward(state, next_state, params, *, tile_b=4096, bf16_inputs=True):
    """Fused Inverse forward pass as a batch-tiled Pallas TPU kernel."""
    w1, b1, w2, b2, w3, b3 = params
    B, F = state.shape
    A = w3.shape[1]
    A_pad = _round_up(A, 128)

    # bf16 matmul operands; f32 accumulation in-kernel.  Biases stay f32.
    # Last layer is zero-padded to 128 output lanes (lane-dense tail).
    w1b = w1.astype(jnp.bfloat16)
    w2b = w2.astype(jnp.bfloat16)
    w3b = jnp.pad(w3, ((0, 0), (0, A_pad - A))).astype(jnp.bfloat16)
    b3p = jnp.pad(b3, ((0, 0), (0, A_pad - A)))

    # Optionally halve the HBM read with bf16 inputs (the subtraction is done
    # as a dot-difference with f32 accumulation in-kernel, so no bf16
    # cancellation on near-equal states).
    in_dtype = jnp.bfloat16 if bf16_inputs else state.dtype
    state_in = state.astype(in_dtype)
    next_in = next_state.astype(in_dtype)

    # Batch tile: multiple of 8 sublanes, capped at tile_b (sized so each grid
    # step moves >= ~0.5 MB of input), and additionally capped at ceil(B/2) so
    # the grid has >= 2 "parallel" steps for v7x's two TensorCores whenever the
    # batch allows it.
    TILE_B = max(8, min(tile_b, _round_up(pl.cdiv(B, 2), 8)))
    padded_B = _round_up(B, TILE_B)
    if padded_B != B:
        pad = padded_B - B
        state_in = jnp.pad(state_in, ((0, pad), (0, 0)))
        next_in = jnp.pad(next_in, ((0, pad), (0, 0)))

    grid = (padded_B // TILE_B,)

    batch_spec = pl.BlockSpec((TILE_B, F), lambda i: (i, 0))

    def resident(arr):  # weights/biases: same block every grid step
        return pl.BlockSpec(arr.shape, lambda i: (0, 0))

    kernel = functools.partial(inverse_kernel, action_size=A)

    out = pl.pallas_call(
        kernel,
        out_shape=jax.ShapeDtypeStruct((padded_B, A), jnp.float32),
        grid=grid,
        in_specs=[
            batch_spec, batch_spec,
            resident(w1b), resident(b1),
            resident(w2b), resident(b2),
            resident(w3b), resident(b3p),
        ],
        out_specs=pl.BlockSpec((TILE_B, A), lambda i: (i, 0)),
        compiler_params=pltpu.CompilerParams(
            dimension_semantics=("parallel",),
            vmem_limit_bytes=32 * 1024 * 1024,
        ),
    )(state_in, next_in, w1b, b1, w2b, b2, w3b, b3p)

    return out[:B]


def init_params(key, feature_size, action_size):
    """Deterministic synthetic parameters matching the nn.Linear shapes.

    PyTorch stores Linear weights as (out, in); we generate in (out, in) and
    transpose to (in, out) for the kernel's x @ W + b convention.
    """
    hidden = feature_size * 2
    ks = jax.random.split(key, 6)

    def lin(kw, kb, fan_in, fan_out):
        bound = 1.0 / jnp.sqrt(fan_in)
        w = jax.random.uniform(kw, (fan_out, fan_in), jnp.float32, -bound, bound)
        b = jax.random.uniform(kb, (fan_out,), jnp.float32, -bound, bound)
        return w.T, b.reshape(1, fan_out)   # (in, out), (1, out)

    w1, b1 = lin(ks[0], ks[1], feature_size, hidden)
    w2, b2 = lin(ks[2], ks[3], hidden, hidden)
    w3, b3 = lin(ks[4], ks[5], hidden, action_size)
    return (w1, b1, w2, b2, w3, b3)


def reference_forward(state, next_state, params):
    """Plain-JAX f32 reference of the PyTorch forward pass."""
    w1, b1, w2, b2, w3, b3 = params
    x = next_state - state
    x = jnp.maximum(x @ w1 + b1, 0.0)
    x = jnp.maximum(x @ w2 + b2, 0.0)
    x = jnp.tanh(x @ w3 + b3)
    return jax.nn.log_softmax(x, axis=-1)


if __name__ == "__main__":
    feature_size = 32
    action_size = 8

    key = jax.random.PRNGKey(0)
    k_state, k_next, k_params = jax.random.split(key, 3)
    params = init_params(k_params, feature_size, action_size)

    # Small-batch check (single tile, single grid step).
    batch = 8
    state = jax.random.normal(k_state, (batch, feature_size), jnp.float32)
    next_state = jax.random.normal(k_next, (batch, feature_size), jnp.float32)

    out = inverse_forward(state, next_state, params)
    out = jax.block_until_ready(out)
    ref = reference_forward(state, next_state, params)
    assert out.shape == (batch, action_size)
    # bf16 inputs + bf16 matmul operands -> relaxed tolerance vs f32 reference.
    assert jnp.allclose(out, ref, atol=7e-2, rtol=7e-2)

    # Larger, non-tile-multiple batch: exercises the >=2-step grid, the
    # ceil(B/2) tile cap, and the zero-padded tail.
    batch2 = 1037
    k_s2, k_n2 = jax.random.split(jax.random.PRNGKey(1), 2)
    state2 = jax.random.normal(k_s2, (batch2, feature_size), jnp.float32)
    next2 = jax.random.normal(k_n2, (batch2, feature_size), jnp.float32)

    out2 = inverse_forward(state2, next2, params)
    out2 = jax.block_until_ready(out2)
    ref2 = reference_forward(state2, next2, params)
    assert out2.shape == (batch2, action_size)
    assert jnp.allclose(out2, ref2, atol=7e-2, rtol=7e-2)

    print("KERNEL_OK")
</pallas_src>

<mosaic_0001>
module attributes {stable_mosaic.version = 11 : i64} {
  func.func @inverse_kernel(%arg0: i32, %arg1: memref<8x32xbf16, #tpu.memory_space<vmem>>, %arg2: memref<8x32xbf16, #tpu.memory_space<vmem>>, %arg3: memref<32x64xbf16, #tpu.memory_space<vmem>>, %arg4: memref<1x64xf32, #tpu.memory_space<vmem>>, %arg5: memref<64x64xbf16, #tpu.memory_space<vmem>>, %arg6: memref<1x64xf32, #tpu.memory_space<vmem>>, %arg7: memref<64x128xbf16, #tpu.memory_space<vmem>>, %arg8: memref<1x128xf32, #tpu.memory_space<vmem>>, %arg9: memref<8x8xf32, #tpu.memory_space<vmem>>) attributes {dimension_semantics = [#tpu.dimension_semantics<parallel>], iteration_bounds = array<i64: 1>, scalar_prefetch = 0 : i64, scratch_operands = 0 : i64, tpu.core_type = #tpu.core_type<tc>, window_params = [{transform_indices = @transform_0, window_bounds = array<i64: 8, 32>}, {transform_indices = @transform_1, window_bounds = array<i64: 8, 32>}, {pipeline_mode = #tpu.pipeline_mode<synchronous>, transform_indices = @transform_2, window_bounds = array<i64: 32, 64>}, {pipeline_mode = #tpu.pipeline_mode<synchronous>, transform_indices = @transform_3, window_bounds = array<i64: 1, 64>}, {pipeline_mode = #tpu.pipeline_mode<synchronous>, transform_indices = @transform_4, window_bounds = array<i64: 64, 64>}, {pipeline_mode = #tpu.pipeline_mode<synchronous>, transform_indices = @transform_5, window_bounds = array<i64: 1, 64>}, {pipeline_mode = #tpu.pipeline_mode<synchronous>, transform_indices = @transform_6, window_bounds = array<i64: 64, 128>}, {pipeline_mode = #tpu.pipeline_mode<synchronous>, transform_indices = @transform_7, window_bounds = array<i64: 1, 128>}, {transform_indices = @transform_8, window_bounds = array<i64: 8, 8>}]} {
    %c0 = arith.constant 0 : index
    %c0_0 = arith.constant 0 : index
    %0 = vector.load %arg3[%c0, %c0_0] : memref<32x64xbf16, #tpu.memory_space<vmem>>, vector<32x64xbf16>
    %c0_1 = arith.constant 0 : index
    %c0_2 = arith.constant 0 : index
    %1 = vector.load %arg2[%c0_1, %c0_2] : memref<8x32xbf16, #tpu.memory_space<vmem>>, vector<8x32xbf16>
    %cst = arith.constant dense<0.000000e+00> : vector<8x64xf32>
    %2 = tpu.matmul %1, %0, %cst {dimension_numbers = #tpu.dot_dimension_numbers<[1], [0], [0], [1], [0, 0, 1, 1], [], []>} : vector<8x32xbf16>, vector<32x64xbf16>, vector<8x64xf32> -> vector<8x64xf32>
    %c0_3 = arith.constant 0 : index
    %c0_4 = arith.constant 0 : index
    %3 = vector.load %arg1[%c0_3, %c0_4] : memref<8x32xbf16, #tpu.memory_space<vmem>>, vector<8x32xbf16>
    %cst_5 = arith.constant dense<0.000000e+00> : vector<8x64xf32>
    %4 = tpu.matmul %3, %0, %cst_5 {dimension_numbers = #tpu.dot_dimension_numbers<[1], [0], [0], [1], [0, 0, 1, 1], [], []>} : vector<8x32xbf16>, vector<32x64xbf16>, vector<8x64xf32> -> vector<8x64xf32>
    %5 = arith.subf %2, %4 : vector<8x64xf32>
    %c0_6 = arith.constant 0 : index
    %c0_7 = arith.constant 0 : index
    %6 = vector.load %arg4[%c0_6, %c0_7] : memref<1x64xf32, #tpu.memory_space<vmem>>, vector<1x64xf32>
    %7 = vector.broadcast %6 : vector<1x64xf32> to vector<8x64xf32>
    %8 = arith.addf %5, %7 : vector<8x64xf32>
    %cst_8 = arith.constant 0.000000e+00 : f32
    %9 = vector.broadcast %cst_8 : f32 to vector<8x64xf32>
    %10 = arith.maximumf %8, %9 : vector<8x64xf32>
    %11 = arith.truncf %10 : vector<8x64xf32> to vector<8x64xbf16>
    %c0_9 = arith.constant 0 : index
    %c0_10 = arith.constant 0 : index
    %12 = vector.load %arg5[%c0_9, %c0_10] : memref<64x64xbf16, #tpu.memory_space<vmem>>, vector<64x64xbf16>
    %cst_11 = arith.constant dense<0.000000e+00> : vector<8x64xf32>
    %13 = tpu.matmul %11, %12, %cst_11 {dimension_numbers = #tpu.dot_dimension_numbers<[1], [0], [0], [1], [0, 0, 1, 1], [], []>} : vector<8x64xbf16>, vector<64x64xbf16>, vector<8x64xf32> -> vector<8x64xf32>
    %c0_12 = arith.constant 0 : index
    %c0_13 = arith.constant 0 : index
    %14 = vector.load %arg6[%c0_12, %c0_13] : memref<1x64xf32, #tpu.memory_space<vmem>>, vector<1x64xf32>
    %15 = vector.broadcast %14 : vector<1x64xf32> to vector<8x64xf32>
    %16 = arith.addf %13, %15 : vector<8x64xf32>
    %cst_14 = arith.constant 0.000000e+00 : f32
    %17 = vector.broadcast %cst_14 : f32 to vector<8x64xf32>
    %18 = arith.maximumf %16, %17 : vector<8x64xf32>
    %19 = arith.truncf %18 : vector<8x64xf32> to vector<8x64xbf16>
    %c0_15 = arith.constant 0 : index
    %c0_16 = arith.constant 0 : index
    %20 = vector.load %arg7[%c0_15, %c0_16] : memref<64x128xbf16, #tpu.memory_space<vmem>>, vector<64x128xbf16>
    %cst_17 = arith.constant dense<0.000000e+00> : vector<8x128xf32>
    %21 = tpu.matmul %19, %20, %cst_17 {dimension_numbers = #tpu.dot_dimension_numbers<[1], [0], [0], [1], [0, 0, 1, 1], [], []>} : vector<8x64xbf16>, vector<64x128xbf16>, vector<8x128xf32> -> vector<8x128xf32>
    %c0_18 = arith.constant 0 : index
    %c0_19 = arith.constant 0 : index
    %22 = vector.load %arg8[%c0_18, %c0_19] : memref<1x128xf32, #tpu.memory_space<vmem>>, vector<1x128xf32>
    %23 = vector.broadcast %22 : vector<1x128xf32> to vector<8x128xf32>
    %24 = arith.addf %21, %23 : vector<8x128xf32>
    %25 = math.tanh %24 : vector<8x128xf32>
    %26 = tpu.iota {dimensions = array<i32: 1>} : vector<1x128xi32>
    %c8_i32 = arith.constant 8 : i32
    %27 = vector.broadcast %c8_i32 : i32 to vector<1x128xi32>
    %28 = arith.cmpi slt, %26, %27 : vector<1x128xi32>
    %cst_20 = arith.constant 0xFF800000 : f32
    %29 = vector.shape_cast %28 : vector<1x128xi1> to vector<1x128xi1>
    %30 = vector.broadcast %29 : vector<1x128xi1> to vector<8x128xi1>
    %31 = vector.broadcast %cst_20 : f32 to vector<8x128xf32>
    %32 = arith.select %30, %25, %31 : vector<8x128xi1>, vector<8x128xf32>
    %cst_21 = arith.constant dense<0xFF800000> : vector<8xf32>
    %33 = vector.multi_reduction <maximumf>, %32, %cst_21 [1] : vector<8x128xf32> to vector<8xf32>
    %34 = vector.shape_cast %33 : vector<8xf32> to vector<8x1xf32>
    %35 = vector.broadcast %34 : vector<8x1xf32> to vector<8x128xf32>
    %36 = arith.subf %32, %35 : vector<8x128xf32>
    %37 = math.exp %36 : vector<8x128xf32>
    %cst_22 = arith.constant dense<0.000000e+00> : vector<8xf32>
    %38 = vector.multi_reduction <add>, %37, %cst_22 [1] : vector<8x128xf32> to vector<8xf32>
    %39 = vector.shape_cast %38 : vector<8xf32> to vector<8x1xf32>
    %40 = math.log %39 : vector<8x1xf32>
    %41 = vector.broadcast %40 : vector<8x1xf32> to vector<8x128xf32>
    %42 = arith.subf %36, %41 : vector<8x128xf32>
    %43 = vector.extract_strided_slice %42 {offsets = [0, 0], sizes = [8, 8], strides = [1, 1]} : vector<8x128xf32> to vector<8x8xf32>
    %c0_23 = arith.constant 0 : index
    %c0_24 = arith.constant 0 : index
    %44 = vector.load %arg9[%c0_23, %c0_24] : memref<8x8xf32, #tpu.memory_space<vmem>>, vector<8x8xf32>
    tpu.vector_store %arg9[%c0_23, %c0_24], %43 {strides = array<i32>} : memref<8x8xf32, #tpu.memory_space<vmem>>, vector<8x8xf32>,
    return
  }
  func.func @transform_0(%arg0: i32) -> (i32, i32) {
    %c0_i32 = arith.constant 0 : i32
    %c0_i32_0 = arith.constant 0 : i32
    return %arg0, %c0_i32 : i32, i32
  }
  func.func @transform_1(%arg0: i32) -> (i32, i32) {
    %c0_i32 = arith.constant 0 : i32
    %c0_i32_0 = arith.constant 0 : i32
    return %arg0, %c0_i32 : i32, i32
  }
  func.func @transform_2(%arg0: i32) -> (i32, i32) {
    %c0_i32 = arith.constant 0 : i32
    %c0_i32_0 = arith.constant 0 : i32
    %c0_i32_1 = arith.constant 0 : i32
    return %c0_i32, %c0_i32_0 : i32, i32
  }
  func.func @transform_3(%arg0: i32) -> (i32, i32) {
    %c0_i32 = arith.constant 0 : i32
    %c0_i32_0 = arith.constant 0 : i32
    %c0_i32_1 = arith.constant 0 : i32
    return %c0_i32, %c0_i32_0 : i32, i32
  }
  func.func @transform_4(%arg0: i32) -> (i32, i32) {
    %c0_i32 = arith.constant 0 : i32
    %c0_i32_0 = arith.constant 0 : i32
    %c0_i32_1 = arith.constant 0 : i32
    return %c0_i32, %c0_i32_0 : i32, i32
  }
  func.func @transform_5(%arg0: i32) -> (i32, i32) {
    %c0_i32 = arith.constant 0 : i32
    %c0_i32_0 = arith.constant 0 : i32
    %c0_i32_1 = arith.constant 0 : i32
    return %c0_i32, %c0_i32_0 : i32, i32
  }
  func.func @transform_6(%arg0: i32) -> (i32, i32) {
    %c0_i32 = arith.constant 0 : i32
    %c0_i32_0 = arith.constant 0 : i32
    %c0_i32_1 = arith.constant 0 : i32
    return %c0_i32, %c0_i32_0 : i32, i32
  }
  func.func @transform_7(%arg0: i32) -> (i32, i32) {
    %c0_i32 = arith.constant 0 : i32
    %c0_i32_0 = arith.constant 0 : i32
    %c0_i32_1 = arith.constant 0 : i32
    return %c0_i32, %c0_i32_0 : i32, i32
  }
  func.func @transform_8(%arg0: i32) -> (i32, i32) {
    %c0_i32 = arith.constant 0 : i32
    %c0_i32_0 = arith.constant 0 : i32
    return %arg0, %c0_i32 : i32, i32
  }
}

</mosaic_0001>

<llo_original>
// kernel: tpu_custom_call.1
$region0: #{tpu_custom_call.1}
  #allocation0 [shape = 'u32[]', space=smem, size = 0x4, offset = 0x4, fixed_abs, tag = 'smem constant byte address 0x4 - core index']
  #allocation1 [shape = 'u32[144,128]{1,0:T(1,128)}', space=vmem, size = 0x12000, scoped, tag = 'internal scratch']
  %s0 = inlined_call_operand.hbm [shape: bf16[8,32], index: 0, kind: input, shape index: {}]
  %s1 = inlined_call_operand.hbm [shape: bf16[8,32], index: 1, kind: input, shape index: {}]
  %s2 = inlined_call_operand.hbm [shape: bf16[32,64], index: 2, kind: input, shape index: {}]
  %s3 = inlined_call_operand.vmem [shape: f32[1,64], index: 3, kind: input, shape index: {}]
  %s4 = inlined_call_operand.hbm [shape: bf16[64,64], index: 4, kind: input, shape index: {}]
  %s5 = inlined_call_operand.vmem [shape: f32[1,64], index: 5, kind: input, shape index: {}]
  %s6 = inlined_call_operand.hbm [shape: bf16[64,128], index: 6, kind: input, shape index: {}]
  %s7 = inlined_call_operand.vmem [shape: f32[1,128], index: 7, kind: input, shape index: {}]
  %s8 = inlined_call_operand.hbm [shape: f32[8,8], index: 8, kind: output, shape index: {}]
  %s9 = sld [smem:[#allocation0]]
  $region62: #{tpu_custom_call.1} parent=0
    _
  %s11 = ssub.s32 1, %s9
  %s12 = scalar_select 0, %s11, %s9
  $region1: #{tpu_custom_call.1} parent=0
    #allocation2 [shape = 'u8[2048]{0}', space=vmem, size = 0x800, scoped, tag = 'input window, operand 0, single buffered']
    #allocation3 [shape = 's32[1]{0}', space=sflag, size = 0x4, scoped, tag = 'scoped memory for tpu_custom_call.1']
    #allocation4 [shape = 's32[1]{0}', space=sflag, size = 0x4, scoped, tag = 'scoped memory for tpu_custom_call.1']
    #allocation5 [shape = 'u8[2048]{0}', space=vmem, size = 0x800, scoped, tag = 'input window, operand 1, single buffered']
    #allocation6 [shape = 's32[1]{0}', space=sflag, size = 0x4, scoped, tag = 'scoped memory for tpu_custom_call.1']
    #allocation7 [shape = 'u8[8192]{0}', space=vmem, size = 0x2000, scoped, tag = 'input window, operand 2, single buffered']
    #allocation8 [shape = 'u8[16384]{0}', space=vmem, size = 0x4000, scoped, tag = 'input window, operand 4, single buffered']
    #allocation9 [shape = 's32[1]{0}', space=sflag, size = 0x4, scoped, tag = 'scoped memory for tpu_custom_call.1']
    #allocation10 [shape = 'u8[16384]{0}', space=vmem, size = 0x4000, scoped, tag = 'input window, operand 6, single buffered']
    #allocation11 [shape = 'u8[4096]{0}', space=vmem, size = 0x1000, scoped, tag = 'output window, operand 0, single buffered']
    %13 = vsyncpa [#allocation3], 0
    %14 = vsyncpa [#allocation6], 0
    %15 = vsyncpa [#allocation9], 0
    %16 = vsyncpa [#allocation4], 0
    // Predicated region
    $region2: #{tpu_custom_call.1} parent=1 // pred_check
      _
    $region3: #{tpu_custom_call.1} parent=1 // pred_check_branch
      %18 = sbr.rel (0) target = $region5
    $region4: #{tpu_custom_call.1} parent=1 // pred_region
      %s20 = ssub.s32 64, 64
      %21 = vsyncadd [#allocation3], %s20
      %s23 = sshll.u32 [#allocation2], 4
      %s24 = int_to_ptr.vmem [resolvable:$true] %s23
      %26 = dma.hbm_to_vmem [thread:$0]  %s0, 64, %s24, [#allocation3]
    $region5: #{tpu_custom_call.1} parent=1 // pred_fallthru
      _
    // Predicated region
    $region6: #{tpu_custom_call.1} parent=1 // pred_check
      _
    $region7: #{tpu_custom_call.1} parent=1 // pred_check_branch
      %28 = sbr.rel (0) target = $region9
    $region8: #{tpu_custom_call.1} parent=1 // pred_region
      %s30 = ssub.s32 64, 64
      %31 = vsyncadd [#allocation6], %s30
      %s33 = sshll.u32 [#allocation5], 4
      %s34 = int_to_ptr.vmem [resolvable:$true] %s33
      %36 = dma.hbm_to_vmem [thread:$0]  %s1, 64, %s34, [#allocation6]
    $region9: #{tpu_custom_call.1} parent=1 // pred_fallthru
      _
    // Predicated region
    $region10: #{tpu_custom_call.1} parent=1 // pred_check
      _
    $region11: #{tpu_custom_call.1} parent=1 // pred_check_branch
      %38 = sbr.rel (0) target = $region13
    $region12: #{tpu_custom_call.1} parent=1 // pred_region
      %s40 = ssub.s32 256, 256
      %41 = vsyncadd [#allocation6], %s40
      %s42 = sshll.u32 [#allocation7], 4
      %s43 = int_to_ptr.vmem [resolvable:$true] %s42
      %48 = dma.hbm_to_vmem [thread:$0]  %s2, 256, %s43, [#allocation6], 64, 64, 4
    $region13: #{tpu_custom_call.1} parent=1 // pred_fallthru
      _
    // Predicated region
    $region14: #{tpu_custom_call.1} parent=1 // pred_check
      _
    $region15: #{tpu_custom_call.1} parent=1 // pred_check_branch
      %50 = sbr.rel (0) target = $region17
    $region16: #{tpu_custom_call.1} parent=1 // pred_region
      _
    $region17: #{tpu_custom_call.1} parent=1 // pred_fallthru
      _
    // Predicated region
    $region18: #{tpu_custom_call.1} parent=1 // pred_check
      _
    $region19: #{tpu_custom_call.1} parent=1 // pred_check_branch
      %52 = sbr.rel (0) target = $region21
    $region20: #{tpu_custom_call.1} parent=1 // pred_region
      %s54 = ssub.s32 512, 512
      %55 = vsyncadd [#allocation9], %s54
      %s56 = sshll.u32 [#allocation8], 4
      %s57 = int_to_ptr.vmem [resolvable:$true] %s56
      %62 = dma.hbm_to_vmem [thread:$0]  %s4, 512, %s57, [#allocation9], 64, 64, 4
    $region21: #{tpu_custom_call.1} parent=1 // pred_fallthru
      _
    // Predicated region
    $region22: #{tpu_custom_call.1} parent=1 // pred_check
      _
    $region23: #{tpu_custom_call.1} parent=1 // pred_check_branch
      %64 = sbr.rel (0) target = $region25
    $region24: #{tpu_custom_call.1} parent=1 // pred_region
      _
    $region25: #{tpu_custom_call.1} parent=1 // pred_fallthru
      _
    // Predicated region
    $region26: #{tpu_custom_call.1} parent=1 // pred_check
      _
    $region27: #{tpu_custom_call.1} parent=1 // pred_check_branch
      %66 = sbr.rel (0) target = $region29
    $region28: #{tpu_custom_call.1} parent=1 // pred_region
      %s68 = ssub.s32 512, 512
      %69 = vsyncadd [#allocation9], %s68
      %s70 = sshll.u32 [#allocation10], 4
      %s71 = int_to_ptr.vmem [resolvable:$true] %s70
      %76 = dma.hbm_to_vmem [thread:$0]  %s6, 512, %s71, [#allocation9], 64, 64, 4
    $region29: #{tpu_custom_call.1} parent=1 // pred_fallthru
      _
    // Predicated region
    $region30: #{tpu_custom_call.1} parent=1 // pred_check
      _
    $region31: #{tpu_custom_call.1} parent=1 // pred_check_branch
      %78 = sbr.rel (0) target = $region33
    $region32: #{tpu_custom_call.1} parent=1 // pred_region
      _
    $region33: #{tpu_custom_call.1} parent=1 // pred_fallthru
      _
    // Predicated region
    $region34: #{tpu_custom_call.1} parent=1 // pred_check
      _
    $region35: #{tpu_custom_call.1} parent=1 // pred_check_branch
      %80 = sbr.rel (0) target = $region37
    $region36: #{tpu_custom_call.1} parent=1 // pred_region
      %81 = dma.done [#allocation3], 64
    $region37: #{tpu_custom_call.1} parent=1 // pred_fallthru
      _
    // Predicated region
    $region38: #{tpu_custom_call.1} parent=1 // pred_check
      _
    $region39: #{tpu_custom_call.1} parent=1 // pred_check_branch
      %83 = sbr.rel (0) target = $region41
    $region40: #{tpu_custom_call.1} parent=1 // pred_region
      %84 = dma.done [#allocation6], 64
    $region41: #{tpu_custom_call.1} parent=1 // pred_fallthru
      _
    // Predicated region
    $region42: #{tpu_custom_call.1} parent=1 // pred_check
      _
    $region43: #{tpu_custom_call.1} parent=1 // pred_check_branch
      %86 = sbr.rel (0) target = $region45
    $region44: #{tpu_custom_call.1} parent=1 // pred_region
      %87 = dma.done [#allocation6], 256
    $region45: #{tpu_custom_call.1} parent=1 // pred_fallthru
      _
    // Predicated region
    $region46: #{tpu_custom_call.1} parent=1 // pred_check
      _
    $region47: #{tpu_custom_call.1} parent=1 // pred_check_branch
      %89 = sbr.rel (0) target = $region49
    $region48: #{tpu_custom_call.1} parent=1 // pred_region
      %90 = dma.done [#allocation9], 512
    $region49: #{tpu_custom_call.1} parent=1 // pred_fallthru
      _
    // Predicated region
    $region50: #{tpu_custom_call.1} parent=1 // pred_check
      _
    $region51: #{tpu_custom_call.1} parent=1 // pred_check_branch
      %92 = sbr.rel (0) target = $region53
    $region52: #{tpu_custom_call.1} parent=1 // pred_region
      %93 = dma.done [#allocation9], 512
    $region53: #{tpu_custom_call.1} parent=1 // pred_fallthru
      _
    %v95 = vld [vmem:[#allocation7] sm:$0xf]
    %v96 = vld [vmem:[#allocation7 + $0x4] sm:$0xf]
    %v97 = vld [vmem:[#allocation7 + $0x8] sm:$0xf]
    %v98 = vld [vmem:[#allocation7 + $0xc] sm:$0xf]
    %v99 = vld [vmem:[#allocation5] sm:$0xf]
    %v104 = vunpack.c.l.b16 %v95
    %v105 = vunpack.c.l.b16 %v96
    %v106 = vunpack.c.l.b16 %v97
    %v107 = vunpack.c.l.b16 %v98
    %v108 = vpack.c.b16 %v105, %v104
    %v109 = vpack.c.b16 %v107, %v106
    %vm112 = vcmask 261120
    %v114 = vsel %vm112, %v99, 0
    %116 = vmatprep.subr.bf16.mxu0 0
    %117 = vmatpush1.bf16.msra.mxu0 %v108
    %118 = vmatprep.subr.bf16.mxu0 0
    %119 = vmatpush1.bf16.msra.mxu0 %v109
    %120 = vmatprep.subr.bf16.mxu0 0
    %121 = vmatpush1.bf16.msra.mxu0 0
    %122 = vmatprep.subr.bf16.mxu0 0
    %123 = vmatpush1.bf16.msra.mxu0 0
    %124 = vmatprep.subr.bf16.mxu0 0
    %125 = vmatpush1.bf16.msra.mxu0 0
    %126 = vmatprep.subr.bf16.mxu0 0
    %127 = vmatpush1.bf16.msra.mxu0 0
    %128 = vmatprep.subr.bf16.mxu0 0
    %129 = vmatpush1.bf16.msra.mxu0 0
    %130 = vmatprep.subr.bf16.mxu0 0
    %131 = vmatpush1.bf16.msra.mxu0 0
    %132 = vmatprep.subr.bf16.mxu0 0
    %133 = vmatpush1.bf16.msra.mxu0 0
    %134 = vmatprep.subr.bf16.mxu0 0
    %135 = vmatpush1.bf16.msra.mxu0 0
    %136 = vmatprep.subr.bf16.mxu0 0
    %137 = vmatpush1.bf16.msra.mxu0 0
    %138 = vmatprep.subr.bf16.mxu0 0
    %139 = vmatpush1.bf16.msra.mxu0 0
    %140 = vmatprep.subr.bf16.mxu0 0
    %141 = vmatpush1.bf16.msra.mxu0 0
    %142 = vmatprep.subr.bf16.mxu0 0
    %143 = vmatpush1.bf16.msra.mxu0 0
    %144 = vmatprep.subr.bf16.mxu0 0
    %145 = vmatpush1.bf16.msra.mxu0 0
    %146 = vmatprep.subr.bf16.mxu0 0
    %147 = vmatpush1.bf16.msra.mxu0 0
    %148 = vmatprep.mubr.bf16.mxu0 0
    %149 = vmatmul.mubr.bf16.gmra.mrb[0].mxu0 %v114
    %v150 = vpop.f32.mrb[0].mxu0
    %v151 = vadd.f32 0.0, %v150
    %v152 = vpop.f32.mrb[0].mxu0
    %v153 = vpop.f32.mrb[0].mxu0
    %v154 = vpop.f32.mrb[0].mxu0
    %155 = vdwg.mxu0
    %v156 = vld [vmem:[#allocation2] sm:$0xf]
    %v158 = vsel %vm112, %v156, 0
    %160 = vmatprep.subr.bf16.mxu0 0
    %161 = vmatpush1.bf16.msra.mxu0 %v108
    %162 = vmatprep.subr.bf16.mxu0 0
    %163 = vmatpush1.bf16.msra.mxu0 %v109
    %164 = vmatprep.subr.bf16.mxu0 0
    %165 = vmatpush1.bf16.msra.mxu0 0
    %166 = vmatprep.subr.bf16.mxu0 0
    %167 = vmatpush1.bf16.msra.mxu0 0
    %168 = vmatprep.subr.bf16.mxu0 0
    %169 = vmatpush1.bf16.msra.mxu0 0
    %170 = vmatprep.subr.bf16.mxu0 0
    %171 = vmatpush1.bf16.msra.mxu0 0
    %172 = vmatprep.subr.bf16.mxu0 0
    %173 = vmatpush1.bf16.msra.mxu0 0
    %174 = vmatprep.subr.bf16.mxu0 0
    %175 = vmatpush1.bf16.msra.mxu0 0
    %176 = vmatprep.subr.bf16.mxu0 0
    %177 = vmatpush1.bf16.msra.mxu0 0
    %178 = vmatprep.subr.bf16.mxu0 0
    %179 = vmatpush1.bf16.msra.mxu0 0
    %180 = vmatprep.subr.bf16.mxu0 0
    %181 = vmatpush1.bf16.msra.mxu0 0
    %182 = vmatprep.subr.bf16.mxu0 0
    %183 = vmatpush1.bf16.msra.mxu0 0
    %184 = vmatprep.subr.bf16.mxu0 0
    %185 = vmatpush1.bf16.msra.mxu0 0
    %186 = vmatprep.subr.bf16.mxu0 0
    %187 = vmatpush1.bf16.msra.mxu0 0
    %188 = vmatprep.subr.bf16.mxu0 0
    %189 = vmatpush1.bf16.msra.mxu0 0
    %190 = vmatprep.subr.bf16.mxu0 0
    %191 = vmatpush1.bf16.msra.mxu0 0
    %192 = vmatprep.mubr.bf16.mxu0 0
    %193 = vmatmul.mubr.bf16.gmra.mrb[0].mxu0 %v158
    %v194 = vpop.f32.mrb[0].mxu0
    %v195 = vadd.f32 0.0, %v194
    %v196 = vpop.f32.mrb[0].mxu0
    %v197 = vpop.f32.mrb[0].mxu0
    %v198 = vpop.f32.mrb[0].mxu0
    %199 = vdwg.mxu0
    %v200 = vsub.f32 %v151, %v195
    %v201 = vld [vmem:[%s3] sm:$0x1]
    %v203 = vlaneseq
    %v204 = vshrl.u32 %v203, 7
    %v205 = vsub.s32 0, %v204
    %v206 = vrot.slane %v201, %v205
    %v208 = vadd.f32 %v200, %v206
    %v209 = vmax.f32 %v208, 0.0
    %v210 = vpack.c.bf16 %v209, %v209
    %v211 = vld [vmem:[#allocation8] sm:$0xf]
    %v212 = vld [vmem:[#allocation8 + $0x4] sm:$0xf]
    %v213 = vld [vmem:[#allocation8 + $0x8] sm:$0xf]
    %v214 = vld [vmem:[#allocation8 + $0xc] sm:$0xf]
    %v215 = vld [vmem:[#allocation8 + $0x10] sm:$0xf]
    %v216 = vld [vmem:[#allocation8 + $0x14] sm:$0xf]
    %v217 = vld [vmem:[#allocation8 + $0x18] sm:$0xf]
    %v218 = vld [vmem:[#allocation8 + $0x1c] sm:$0xf]
    %v219 = vld [vmem:[%s5] sm:$0x1]
    %v221 = vlaneseq
    %v222 = vshrl.u32 %v221, 7
    %v223 = vsub.s32 0, %v222
    %v224 = vrot.slane %v219, %v223
    %v234 = vunpack.c.l.b16 %v211
    %v235 = vunpack.c.l.b16 %v212
    %v236 = vunpack.c.l.b16 %v213
    %v237 = vunpack.c.l.b16 %v214
    %v238 = vunpack.c.l.b16 %v215
    %v239 = vunpack.c.l.b16 %v216
    %v240 = vunpack.c.l.b16 %v217
    %v241 = vunpack.c.l.b16 %v218
    %v242 = vpack.c.b16 %v235, %v234
    %v243 = vpack.c.b16 %v237, %v236
    %v244 = vpack.c.b16 %v239, %v238
    %v245 = vpack.c.b16 %v241, %v240
    %vm250 = vcmask 523264
    %v252 = vsel %vm250, %v210, 0
    %254 = vmatprep.subr.bf16.mxu0 0
    %255 = vmatpush1.bf16.msra.mxu0 %v242
    %256 = vmatprep.subr.bf16.mxu0 0
    %257 = vmatpush1.bf16.msra.mxu0 %v243
    %258 = vmatprep.subr.bf16.mxu0 0
    %259 = vmatpush1.bf16.msra.mxu0 %v244
    %260 = vmatprep.subr.bf16.mxu0 0
    %261 = vmatpush1.bf16.msra.mxu0 %v245
    %262 = vmatprep.subr.bf16.mxu0 0
    %263 = vmatpush1.bf16.msra.mxu0 0
    %264 = vmatprep.subr.bf16.mxu0 0
    %265 = vmatpush1.bf16.msra.mxu0 0
    %266 = vmatprep.subr.bf16.mxu0 0
    %267 = vmatpush1.bf16.msra.mxu0 0
    %268 = vmatprep.subr.bf16.mxu0 0
    %269 = vmatpush1.bf16.msra.mxu0 0
    %270 = vmatprep.subr.bf16.mxu0 0
    %271 = vmatpush1.bf16.msra.mxu0 0
    %272 = vmatprep.subr.bf16.mxu0 0
    %273 = vmatpush1.bf16.msra.mxu0 0
    %274 = vmatprep.subr.bf16.mxu0 0
    %275 = vmatpush1.bf16.msra.mxu0 0
    %276 = vmatprep.subr.bf16.mxu0 0
    %277 = vmatpush1.bf16.msra.mxu0 0
    %278 = vmatprep.subr.bf16.mxu0 0
    %279 = vmatpush1.bf16.msra.mxu0 0
    %280 = vmatprep.subr.bf16.mxu0 0
    %281 = vmatpush1.bf16.msra.mxu0 0
    %282 = vmatprep.subr.bf16.mxu0 0
    %283 = vmatpush1.bf16.msra.mxu0 0
    %284 = vmatprep.subr.bf16.mxu0 0
    %285 = vmatpush1.bf16.msra.mxu0 0
    %286 = vmatprep.mubr.bf16.mxu0 0
    %287 = vmatmul.mubr.bf16.gmra.mrb[0].mxu0 %v252
    %v288 = vpop.f32.mrb[0].mxu0
    %v289 = vadd.f32 %v224, %v288
    %v290 = vpop.f32.mrb[0].mxu0
    %v291 = vpop.f32.mrb[0].mxu0
    %v292 = vpop.f32.mrb[0].mxu0
    %293 = vdwg.mxu0
    %v294 = vmax.f32 %v289, 0.0
    %v295 = vpack.c.bf16 %v294, %v294
    %v296 = vld [vmem:[#allocation10] sm:$0xf]
    %v297 = vld [vmem:[#allocation10 + $0x4] sm:$0xf]
    %v298 = vld [vmem:[#allocation10 + $0x8] sm:$0xf]
    %v299 = vld [vmem:[#allocation10 + $0xc] sm:$0xf]
    %v300 = vld [vmem:[#allocation10 + $0x10] sm:$0xf]
    %v301 = vld [vmem:[#allocation10 + $0x14] sm:$0xf]
    %v302 = vld [vmem:[#allocation10 + $0x18] sm:$0xf]
    %v303 = vld [vmem:[#allocation10 + $0x1c] sm:$0xf]
    %v304 = vld [vmem:[%s7] sm:$0x1]
    %v306 = vlaneseq
    %v307 = vshrl.u32 %v306, 7
    %v308 = vsub.s32 0, %v307
    %v309 = vrot.slane %v304, %v308
    %v319 = vunpack.c.l.b16 %v296
    %v320 = vunpack.c.l.b16 %v297
    %v321 = vunpack.c.l.b16 %v298
    %v322 = vunpack.c.l.b16 %v299
    %v323 = vunpack.c.l.b16 %v300
    %v324 = vunpack.c.l.b16 %v301
    %v325 = vunpack.c.l.b16 %v302
    %v326 = vunpack.c.l.b16 %v303
    %v327 = vpack.c.b16 %v320, %v319
    %v328 = vpack.c.b16 %v322, %v321
    %v329 = vpack.c.b16 %v324, %v323
    %v330 = vpack.c.b16 %v326, %v325
    %v336 = vsel %vm250, %v295, 0
    %338 = vmatprep.subr.bf16.mxu0 0
    %339 = vmatpush1.bf16.msra.mxu0 %v327
    %340 = vmatprep.subr.bf16.mxu0 0
    %341 = vmatpush1.bf16.msra.mxu0 %v328
    %342 = vmatprep.subr.bf16.mxu0 0
    %343 = vmatpush1.bf16.msra.mxu0 %v329
    %344 = vmatprep.subr.bf16.mxu0 0
    %345 = vmatpush1.bf16.msra.mxu0 %v330
    %346 = vmatprep.subr.bf16.mxu0 0
    %347 = vmatpush1.bf16.msra.mxu0 0
    %348 = vmatprep.subr.bf16.mxu0 0
    %349 = vmatpush1.bf16.msra.mxu0 0
    %350 = vmatprep.subr.bf16.mxu0 0
    %351 = vmatpush1.bf16.msra.mxu0 0
    %352 = vmatprep.subr.bf16.mxu0 0
    %353 = vmatpush1.bf16.msra.mxu0 0
    %354 = vmatprep.subr.bf16.mxu0 0
    %355 = vmatpush1.bf16.msra.mxu0 0
    %356 = vmatprep.subr.bf16.mxu0 0
    %357 = vmatpush1.bf16.msra.mxu0 0
    %358 = vmatprep.subr.bf16.mxu0 0
    %359 = vmatpush1.bf16.msra.mxu0 0
    %360 = vmatprep.subr.bf16.mxu0 0
    %361 = vmatpush1.bf16.msra.mxu0 0
    %362 = vmatprep.subr.bf16.mxu0 0
    %363 = vmatpush1.bf16.msra.mxu0 0
    %364 = vmatprep.subr.bf16.mxu0 0
    %365 = vmatpush1.bf16.msra.mxu0 0
    %366 = vmatprep.subr.bf16.mxu0 0
    %367 = vmatpush1.bf16.msra.mxu0 0
    %368 = vmatprep.subr.bf16.mxu0 0
    %369 = vmatpush1.bf16.msra.mxu0 0
    %370 = vmatprep.mubr.bf16.mxu0 0
    %371 = vmatmul.mubr.bf16.gmra.mrb[0].mxu0 %v336
    %v372 = vpop.f32.mrb[0].mxu0
    %v373 = vadd.f32 %v309, %v372
    %v374 = vpop.f32.mrb[0].mxu0
    %v375 = vpop.f32.mrb[0].mxu0
    %v376 = vpop.f32.mrb[0].mxu0
    %377 = vdwg.mxu0
    %v378 = vtanh.pop %v373
    %v379 = vlaneseq
    %v380 = vand.u32 %v379, 127
    %vm381 = vcmp.lt.s32.totalorder %v380, 8
    %v382 = vsel %vm381, 1, 0
    %vm383 = vcmp.eq.s32.totalorder %v382, 1
    %v384 = vsel %vm383, %v378, -inf
    %385 = vmax.xlane.f32.xlu0 %v384
    %v386 = vpop.xlane.xlu0 %385
    %v387 = vsub.f32 %v384, %v386
    %v388 = vmul.f32 %v387, 1.442695
    %v389 = vpow.pop %v388
    %390 = vadd.xlane.f32.xlu0 %v389
    %v391 = vpop.xlane.xlu0 %390
    %v392 = vlog2.pop %v391
    %v393 = vmul.f32 %v392, 0.6931472
    %v394 = vsub.f32 %v387, %v393
    %vm395 = vcmask 64512
    %396 = vst.msk [vmem:[#allocation11] sm:$0xff] %vm395, %v394
    // Predicated region
    $region54: #{tpu_custom_call.1} parent=1 // pred_check
      _
    $region55: #{tpu_custom_call.1} parent=1 // pred_check_branch
      %398 = sbr.rel (0) target = $region57
    $region56: #{tpu_custom_call.1} parent=1 // pred_region
      %s400 = ssub.s32 128, 128
      %401 = vsyncadd [#allocation4], %s400
      %s403 = sshll.u32 [#allocation11], 4
      %s404 = int_to_ptr.vmem [resolvable:$true] %s403
      %406 = dma.vmem_to_hbm [thread:$0]  %s404, 128, %s8, [#allocation4]
    $region57: #{tpu_custom_call.1} parent=1 // pred_fallthru
      _
    // Predicated region
    $region58: #{tpu_custom_call.1} parent=1 // pred_check
      _
    $region59: #{tpu_custom_call.1} parent=1 // pred_check_branch
      %408 = sbr.rel (0) target = $region61
    $region60: #{tpu_custom_call.1} parent=1 // pred_region
      %409 = dma.done [#allocation4], 128
    $region61: #{tpu_custom_call.1} parent=1 // pred_fallthru
      _
    %410 = vsyncpa [#allocation3], 1
    %411 = vsyncpa [#allocation6], 1
    %412 = vsyncpa [#allocation9], 1
    %413 = vsyncpa [#allocation4], 1

</llo_original>
